<compile_context>
chip_gen: v6e
topology: v6e:2x2x1
jax: 0.10.0
libtpu: 0.0.40
codegen_flags: <defaults>
</compile_context>

<pallas_src>
import jax
import jax.numpy as jnp
from jax.experimental import pallas as pl
from jax.experimental.pallas import tpu as pltpu

EPS = 1e-5
VMEM_LIMIT = 32 * 1024 * 1024  # safe on v5e/v6e/v7x


# --------------------------------------------------------------------------
# Kernels
# --------------------------------------------------------------------------
def conv3x3_kernel(x_ref, w_ref, y_ref, stats_ref):
    """3x3 conv (padding already applied, kx pre-packed on channels).

    x_ref:     (1, H+2, W, 3*Cin)   kx-packed padded input tile
    w_ref:     (3, 3*Cin, Cout)     taps grouped by ky
    y_ref:     (1, H, W, Cout)      pre-BN conv output (f32)
    stats_ref: (1, 2, Cout)         per-tile [sum, sum_of_squares] over H*W
    """
    _, Hp, W, K = x_ref.shape
    H = Hp - 2
    Cout = y_ref.shape[-1]
    M = H * W

    x = x_ref[0]                                     # (Hp, W, K)

    acc = jnp.zeros((M, Cout), jnp.float32)
    for ky in range(3):
        # Slice along the major (non-layout) H axis: free, no relayout.
        patch = x[ky:ky + H].reshape(M, K)           # (M, 3*Cin)
        acc += jnp.dot(patch, w_ref[ky],
                       preferred_element_type=jnp.float32)

    y_ref[0] = acc.reshape(H, W, Cout).astype(y_ref.dtype)

    # Single-pass BN statistics for this tile (reduced across tiles outside).
    stats_ref[0, 0:1, :] = jnp.sum(acc, axis=0, keepdims=True)
    stats_ref[0, 1:2, :] = jnp.sum(acc * acc, axis=0, keepdims=True)


def bn_relu_kernel(y_ref, scale_ref, shift_ref, o_ref):
    """Folded BatchNorm + ReLU: out = max(y*scale + shift, 0)."""
    _, H, W, C = y_ref.shape
    y = y_ref[0].reshape(H * W, C)
    out = jnp.maximum(y * scale_ref[...] + shift_ref[...], 0.0)
    o_ref[0] = out.reshape(H, W, C).astype(o_ref.dtype)


# --------------------------------------------------------------------------
# Pallas-call wrappers
# --------------------------------------------------------------------------
def _conv3x3(x_packed, w3, cout):
    """x_packed: (N, H+2, W, 3*Cin).  Returns (y, stats)."""
    N, Hp, W, K = x_packed.shape
    H = Hp - 2
    y, stats = pl.pallas_call(
        conv3x3_kernel,
        out_shape=(jax.ShapeDtypeStruct((N, H, W, cout), jnp.float32),
                   jax.ShapeDtypeStruct((N, 2, cout), jnp.float32)),
        grid=(N,),
        in_specs=[
            pl.BlockSpec((1, Hp, W, K), lambda n: (n, 0, 0, 0)),
            pl.BlockSpec((3, K, cout), lambda n: (0, 0, 0)),
        ],
        out_specs=(
            pl.BlockSpec((1, H, W, cout), lambda n: (n, 0, 0, 0)),
            pl.BlockSpec((1, 2, cout), lambda n: (n, 0, 0)),
        ),
        compiler_params=pltpu.CompilerParams(
            dimension_semantics=("parallel",),
            vmem_limit_bytes=VMEM_LIMIT),
    )(x_packed, w3)
    return y, stats


def _bn_relu(y, scale, shift):
    N, H, W, C = y.shape
    scale2d = scale.reshape(1, C).astype(jnp.float32)
    shift2d = shift.reshape(1, C).astype(jnp.float32)
    return pl.pallas_call(
        bn_relu_kernel,
        out_shape=jax.ShapeDtypeStruct((N, H, W, C), jnp.float32),
        grid=(N,),
        in_specs=[
            pl.BlockSpec((1, H, W, C), lambda n: (n, 0, 0, 0)),
            pl.BlockSpec((1, C), lambda n: (0, 0)),
            pl.BlockSpec((1, C), lambda n: (0, 0)),
        ],
        out_specs=pl.BlockSpec((1, H, W, C), lambda n: (n, 0, 0, 0)),
        compiler_params=pltpu.CompilerParams(
            dimension_semantics=("parallel",),
            vmem_limit_bytes=VMEM_LIMIT),
    )(y, scale2d, shift2d)


# --------------------------------------------------------------------------
# Host-side glue
# --------------------------------------------------------------------------
def _pack_kx(xp):
    """(N, Hp, Wp, C) zero-padded -> (N, Hp, W, 3*C), channel = kx*C + c."""
    W = xp.shape[2] - 2
    return jnp.concatenate([xp[:, :, kx:kx + W, :] for kx in range(3)],
                           axis=-1)


def _prep_w(w):
    """(Cout, Cin, 3, 3) -> (3, 3*Cin, Cout); index [ky, kx*Cin+ci, co]."""
    cout, cin = w.shape[0], w.shape[1]
    return jnp.transpose(w, (2, 3, 1, 0)).reshape(3, 3 * cin, cout)


def _fold_bn(stats, gamma, beta, count):
    """stats: (N_tiles, 2, C) of [sum, sumsq] -> (scale, shift) per channel."""
    s = jnp.sum(stats[:, 0, :], axis=0)
    ss = jnp.sum(stats[:, 1, :], axis=0)
    mean = s / count
    var = jnp.maximum(ss / count - mean * mean, 0.0)   # biased (train-mode) var
    scale = gamma * jax.lax.rsqrt(var + EPS)
    shift = beta - mean * scale
    return scale, shift


def double_conv(x_nchw, params, compute_dtype=jnp.float32):
    """x_nchw: (N, Cin, H, W) float32.  Returns (N, Cout, H, W) float32.

    Note: conv biases b1/b2 are intentionally NOT applied — they are exactly
    cancelled by the train-mode BatchNorm mean subtraction.
    """
    N, Cin, H, W = x_nchw.shape
    Cout = params["w1"].shape[0]
    count = N * H * W

    x = jnp.transpose(x_nchw.astype(jnp.float32), (0, 2, 3, 1))    # NHWC
    xp = jnp.pad(x, ((0, 0), (1, 1), (1, 1), (0, 0)))
    x1 = _pack_kx(xp).astype(compute_dtype)
    w1 = _prep_w(params["w1"]).astype(compute_dtype)

    # ---- block 1: conv -> BN(batch stats) -> ReLU ----
    y1, stats1 = _conv3x3(x1, w1, Cout)
    scale1, shift1 = _fold_bn(stats1, params["gamma1"], params["beta1"], count)
    h1 = _bn_relu(y1, scale1, shift1)

    # ---- block 2: conv -> BN(batch stats) -> ReLU ----
    h1p = jnp.pad(h1, ((0, 0), (1, 1), (1, 1), (0, 0)))
    x2 = _pack_kx(h1p).astype(compute_dtype)
    w2 = _prep_w(params["w2"]).astype(compute_dtype)
    y2, stats2 = _conv3x3(x2, w2, Cout)
    scale2, shift2 = _fold_bn(stats2, params["gamma2"], params["beta2"], count)
    out = _bn_relu(y2, scale2, shift2)

    return jnp.transpose(out, (0, 3, 1, 2))            # back to NCHW


# --------------------------------------------------------------------------
# Pure-JAX reference (exact PyTorch semantics, incl. conv bias)
# --------------------------------------------------------------------------
def ref_double_conv(x, params):
    def block(x, w, b, g, beta):
        y = jax.lax.conv_general_dilated(
            x, w, (1, 1), "SAME",
            dimension_numbers=("NCHW", "OIHW", "NCHW"))
        y = y + b[None, :, None, None]
        mean = y.mean(axis=(0, 2, 3), keepdims=True)
        var = ((y - mean) ** 2).mean(axis=(0, 2, 3), keepdims=True)
        y = (y - mean) * jax.lax.rsqrt(var + EPS)
        y = y * g[None, :, None, None] + beta[None, :, None, None]
        return jnp.maximum(y, 0.0)

    h = block(x, params["w1"], params["b1"], params["gamma1"], params["beta1"])
    return block(h, params["w2"], params["b2"], params["gamma2"], params["beta2"])


def init_params(key, in_channels, out_channels):
    ks = jax.random.split(key, 8)
    return {
        "w1": 0.1 * jax.random.normal(ks[0], (out_channels, in_channels, 3, 3), jnp.float32),
        "b1": 0.1 * jax.random.normal(ks[1], (out_channels,), jnp.float32),
        "gamma1": 1.0 + 0.1 * jax.random.normal(ks[2], (out_channels,), jnp.float32),
        "beta1": 0.1 * jax.random.normal(ks[3], (out_channels,), jnp.float32),
        "w2": 0.1 * jax.random.normal(ks[4], (out_channels, out_channels, 3, 3), jnp.float32),
        "b2": 0.1 * jax.random.normal(ks[5], (out_channels,), jnp.float32),
        "gamma2": 1.0 + 0.1 * jax.random.normal(ks[6], (out_channels,), jnp.float32),
        "beta2": 0.1 * jax.random.normal(ks[7], (out_channels,), jnp.float32),
    }


if __name__ == "__main__":
    key = jax.random.PRNGKey(0)
    k_x, k_p = jax.random.split(key)

    N, Cin, Cout, H, W = 2, 4, 8, 16, 16
    x = jax.random.normal(k_x, (N, Cin, H, W), jnp.float32)
    params = init_params(k_p, Cin, Cout)

    ref = jax.block_until_ready(ref_double_conv(x, params))

    # f32 path: tight check against the PyTorch-semantics reference.
    out = jax.block_until_ready(double_conv(x, params))
    assert out.shape == (N, Cout, H, W)
    assert jnp.allclose(out, ref, rtol=5e-4, atol=5e-4), "f32 mismatch vs reference"

    # bf16 MXU operands (f32 accumulation + f32 BN math): loose tolerance.
    out_bf16 = jax.block_until_ready(
        double_conv(x, params, compute_dtype=jnp.bfloat16))
    assert jnp.allclose(out_bf16, ref, rtol=1e-1, atol=1e-1), "bf16 mismatch vs reference"

    print("KERNEL_OK")
</pallas_src>

<mosaic_0001>
module attributes {stable_mosaic.version = 11 : i64} {
  func.func @conv3x3_kernel(%arg0: i32, %arg1: memref<1x18x16x12xf32, #tpu.memory_space<vmem>>, %arg2: memref<3x12x8xf32, #tpu.memory_space<vmem>>, %arg3: memref<1x16x16x8xf32, #tpu.memory_space<vmem>>, %arg4: memref<1x2x8xf32, #tpu.memory_space<vmem>>) attributes {dimension_semantics = [#tpu.dimension_semantics<parallel>], iteration_bounds = array<i64: 2>, scalar_prefetch = 0 : i64, scratch_operands = 0 : i64, tpu.core_type = #tpu.core_type<tc>, window_params = [{transform_indices = @transform_0, window_bounds = array<i64: 1, 18, 16, 12>}, {pipeline_mode = #tpu.pipeline_mode<synchronous>, transform_indices = @transform_1, window_bounds = array<i64: 3, 12, 8>}, {transform_indices = @transform_2, window_bounds = array<i64: 1, 16, 16, 8>}, {transform_indices = @transform_3, window_bounds = array<i64: 1, 2, 8>}]} {
    %c0 = arith.constant 0 : index
    %c0_0 = arith.constant 0 : index
    %c0_1 = arith.constant 0 : index
    %c0_2 = arith.constant 0 : index
    %0 = vector.load %arg1[%c0, %c0_0, %c0_1, %c0_2] : memref<1x18x16x12xf32, #tpu.memory_space<vmem>>, vector<1x18x16x12xf32>
    %1 = vector.shape_cast %0 : vector<1x18x16x12xf32> to vector<18x16x12xf32>
    %cst = arith.constant 0.000000e+00 : f32
    %2 = vector.broadcast %cst : f32 to vector<256x8xf32>
    %3 = vector.extract_strided_slice %1 {offsets = [0, 0, 0], sizes = [16, 16, 12], strides = [1, 1, 1]} : vector<18x16x12xf32> to vector<16x16x12xf32>
    %4 = vector.shape_cast %3 : vector<16x16x12xf32> to vector<256x12xf32>
    %c0_3 = arith.constant 0 : index
    %c0_4 = arith.constant 0 : index
    %c0_5 = arith.constant 0 : index
    %5 = vector.load %arg2[%c0_3, %c0_4, %c0_5] : memref<3x12x8xf32, #tpu.memory_space<vmem>>, vector<1x12x8xf32>
    %6 = vector.shape_cast %5 : vector<1x12x8xf32> to vector<12x8xf32>
    %cst_6 = arith.constant dense<0.000000e+00> : vector<256x8xf32>
    %7 = tpu.matmul %4, %6, %cst_6 {dimension_numbers = #tpu.dot_dimension_numbers<[1], [0], [0], [1], [0, 0, 1, 1], [], []>} : vector<256x12xf32>, vector<12x8xf32>, vector<256x8xf32> -> vector<256x8xf32>
    %8 = arith.addf %2, %7 : vector<256x8xf32>
    %9 = vector.extract_strided_slice %1 {offsets = [1, 0, 0], sizes = [16, 16, 12], strides = [1, 1, 1]} : vector<18x16x12xf32> to vector<16x16x12xf32>
    %10 = vector.shape_cast %9 : vector<16x16x12xf32> to vector<256x12xf32>
    %c1 = arith.constant 1 : index
    %c0_7 = arith.constant 0 : index
    %c0_8 = arith.constant 0 : index
    %11 = vector.load %arg2[%c1, %c0_7, %c0_8] : memref<3x12x8xf32, #tpu.memory_space<vmem>>, vector<1x12x8xf32>
    %12 = vector.shape_cast %11 : vector<1x12x8xf32> to vector<12x8xf32>
    %cst_9 = arith.constant dense<0.000000e+00> : vector<256x8xf32>
    %13 = tpu.matmul %10, %12, %cst_9 {dimension_numbers = #tpu.dot_dimension_numbers<[1], [0], [0], [1], [0, 0, 1, 1], [], []>} : vector<256x12xf32>, vector<12x8xf32>, vector<256x8xf32> -> vector<256x8xf32>
    %14 = arith.addf %8, %13 : vector<256x8xf32>
    %15 = vector.extract_strided_slice %1 {offsets = [2, 0, 0], sizes = [16, 16, 12], strides = [1, 1, 1]} : vector<18x16x12xf32> to vector<16x16x12xf32>
    %16 = vector.shape_cast %15 : vector<16x16x12xf32> to vector<256x12xf32>
    %c2 = arith.constant 2 : index
    %c0_10 = arith.constant 0 : index
    %c0_11 = arith.constant 0 : index
    %17 = vector.load %arg2[%c2, %c0_10, %c0_11] : memref<3x12x8xf32, #tpu.memory_space<vmem>>, vector<1x12x8xf32>
    %18 = vector.shape_cast %17 : vector<1x12x8xf32> to vector<12x8xf32>
    %cst_12 = arith.constant dense<0.000000e+00> : vector<256x8xf32>
    %19 = tpu.matmul %16, %18, %cst_12 {dimension_numbers = #tpu.dot_dimension_numbers<[1], [0], [0], [1], [0, 0, 1, 1], [], []>} : vector<256x12xf32>, vector<12x8xf32>, vector<256x8xf32> -> vector<256x8xf32>
    %20 = arith.addf %14, %19 : vector<256x8xf32>
    %21 = vector.shape_cast %20 : vector<256x8xf32> to vector<16x16x8xf32>
    %c0_13 = arith.constant 0 : index
    %c0_14 = arith.constant 0 : index
    %c0_15 = arith.constant 0 : index
    %c0_16 = arith.constant 0 : index
    %22 = vector.load %arg3[%c0_13, %c0_14, %c0_15, %c0_16] : memref<1x16x16x8xf32, #tpu.memory_space<vmem>>, vector<1x16x16x8xf32>
    %23 = vector.shape_cast %22 : vector<1x16x16x8xf32> to vector<16x16x8xf32>
    %24 = vector.shape_cast %21 : vector<16x16x8xf32> to vector<1x16x16x8xf32>
    tpu.vector_store %arg3[%c0_13, %c0_14, %c0_15, %c0_16], %24 {strides = array<i32>} : memref<1x16x16x8xf32, #tpu.memory_space<vmem>>, vector<1x16x16x8xf32>,
    %cst_17 = arith.constant dense<0.000000e+00> : vector<8xf32>
    %25 = vector.multi_reduction <add>, %20, %cst_17 [0] : vector<256x8xf32> to vector<8xf32>
    %26 = vector.shape_cast %25 : vector<8xf32> to vector<1x8xf32>
    %c0_18 = arith.constant 0 : index
    %c0_19 = arith.constant 0 : index
    %c0_20 = arith.constant 0 : index
    %27 = vector.load %arg4[%c0_18, %c0_19, %c0_20] : memref<1x2x8xf32, #tpu.memory_space<vmem>>, vector<1x1x8xf32>
    %28 = vector.shape_cast %27 : vector<1x1x8xf32> to vector<1x8xf32>
    %29 = vector.shape_cast %26 : vector<1x8xf32> to vector<1x1x8xf32>
    tpu.vector_store %arg4[%c0_18, %c0_19, %c0_20], %29 {strides = array<i32>} : memref<1x2x8xf32, #tpu.memory_space<vmem>>, vector<1x1x8xf32>,
    %30 = arith.mulf %20, %20 : vector<256x8xf32>
    %cst_21 = arith.constant dense<0.000000e+00> : vector<8xf32>
    %31 = vector.multi_reduction <add>, %30, %cst_21 [0] : vector<256x8xf32> to vector<8xf32>
    %32 = vector.shape_cast %31 : vector<8xf32> to vector<1x8xf32>
    %c0_22 = arith.constant 0 : index
    %c1_23 = arith.constant 1 : index
    %c0_24 = arith.constant 0 : index
    %33 = vector.load %arg4[%c0_22, %c1_23, %c0_24] : memref<1x2x8xf32, #tpu.memory_space<vmem>>, vector<1x1x8xf32>
    %34 = vector.shape_cast %33 : vector<1x1x8xf32> to vector<1x8xf32>
    %35 = vector.shape_cast %32 : vector<1x8xf32> to vector<1x1x8xf32>
    tpu.vector_store %arg4[%c0_22, %c1_23, %c0_24], %35 {strides = array<i32>} : memref<1x2x8xf32, #tpu.memory_space<vmem>>, vector<1x1x8xf32>,
    return
  }
  func.func @transform_0(%arg0: i32) -> (i32, i32, i32, i32) {
    %c0_i32 = arith.constant 0 : i32
    %c0_i32_0 = arith.constant 0 : i32
    %c0_i32_1 = arith.constant 0 : i32
    %c0_i32_2 = arith.constant 0 : i32
    return %arg0, %c0_i32, %c0_i32_0, %c0_i32_1 : i32, i32, i32, i32
  }
  func.func @transform_1(%arg0: i32) -> (i32, i32, i32) {
    %c0_i32 = arith.constant 0 : i32
    %c0_i32_0 = arith.constant 0 : i32
    %c0_i32_1 = arith.constant 0 : i32
    %c0_i32_2 = arith.constant 0 : i32
    return %c0_i32, %c0_i32_0, %c0_i32_1 : i32, i32, i32
  }
  func.func @transform_2(%arg0: i32) -> (i32, i32, i32, i32) {
    %c0_i32 = arith.constant 0 : i32
    %c0_i32_0 = arith.constant 0 : i32
    %c0_i32_1 = arith.constant 0 : i32
    %c0_i32_2 = arith.constant 0 : i32
    return %arg0, %c0_i32, %c0_i32_0, %c0_i32_1 : i32, i32, i32, i32
  }
  func.func @transform_3(%arg0: i32) -> (i32, i32, i32) {
    %c0_i32 = arith.constant 0 : i32
    %c0_i32_0 = arith.constant 0 : i32
    %c0_i32_1 = arith.constant 0 : i32
    return %arg0, %c0_i32, %c0_i32_0 : i32, i32, i32
  }
}

</mosaic_0001>

<llo_original>
// kernel: tpu_custom_call.1
$region0: #{tpu_custom_call.1}
  #allocation0 [shape = 'u32[]', space=smem, size = 0x4, offset = 0x4, fixed_abs, tag = 'smem constant byte address 0x4 - core index']
  #allocation1 [shape = 'u32[144,128]{1,0:T(1,128)}', space=vmem, size = 0x12000, scoped, tag = 'internal scratch']
  %s0 = inlined_call_operand.vmem [shape: f32[2,18,16,12], index: 0, kind: input, shape index: {}]
  %s1 = inlined_call_operand.vmem [shape: f32[3,12,8], index: 1, kind: input, shape index: {}]
  %s2 = inlined_call_operand.vmem [shape: f32[2,16,16,8], index: 2, kind: output, shape index: {0}]
  %s3 = inlined_call_operand.hbm [shape: f32[2,2,8], index: 3, kind: output, shape index: {1}]
  %4 = xla_tuple %s2, %s3
  %s5 = sld [smem:[#allocation0]]
  $region49: #{tpu_custom_call.1} parent=0
    _
  %s7 = ssub.s32 1, %s5
  %s8 = scalar_select 0, %s7, %s5
  $region1: #{tpu_custom_call.1} parent=0
    #allocation2 [shape = 'u8[2048]{0}', space=vmem, size = 0x800, scoped, tag = 'output window, operand 1']
    #allocation3 [shape = 's32[2]{0}', space=sflag, size = 0x8, scoped, tag = 'scoped memory for tpu_custom_call.1']
    %9 = vsyncpa [#allocation3], 0
    %s10 = scalar_lea.sflag [#allocation3], 1
    %11 = vsyncpa %s10, 0
    loop: start=0, step=1, limit=4
    $region2: #{tpu_custom_call.1} parent=1 // loop_pre_header
      _
    $region3: #{tpu_custom_call.1} parent=1 // loop_header
      %s13 = sphi 0, %s17
      %p14 = scmp.ge.s32.totalorder %s13, 4
      %s23 = sphi 0, %s25
      %s26 = sphi 0, %s23
      %s27 = sphi 0, %s26
      %s43 = sphi 0, %s27
      %s47 = sphi 0, %s47
      %s49 = sphi 0, %s47
      %s50 = sphi 0, %s49
      %s64 = sphi 0, %s50
      %s70 = sphi 0, %s72
      %s73 = sphi 0, %s70
      %s74 = sphi 0, %s73
      %s90 = sphi 0, %s74
      %s96 = sphi 0, %s98
      %s99 = sphi 0, %s96
      %s100 = sphi 0, %s99
      %s116 = sphi 0, %s100
    $region4: #{tpu_custom_call.1} parent=1 // loop_header_branch
      %16 = sbr.rel (%p14) target = $region8
    $region5: #{tpu_custom_call.1} parent=1 // loop_body
      %s18 = ssub.s32 %s13, 1
      %s19 = ssub.s32 %s13, 2
      %s20 = sadd.s32 %s13, 1
      %s21 = ssub.s32 %s13, %s20
      %p22 = scmp.eq.s32.totalorder %s21, 0
      %s24 = sadd.s32 %s23, 1
      %s25 = scalar_select %p22, %s23, %s24
      %p28 = pneg %p22
      %p29 = scmp.eq.s32.totalorder %s13, 1
      %p30 = por %p28, %p29
      %p31 = scmp.ne.s32.totalorder %s23, %s26
      %p32 = scmp.eq.s32.totalorder %s13, 0
      %p33 = por %p31, %p32
      %p34 = scmp.ne.s32.totalorder %s23, %s26
      %p35 = scmp.eq.s32.totalorder %s18, 1
      %p36 = por %p34, %p35
      %p37 = scmp.ne.s32.totalorder %s26, %s27
      %p38 = scmp.eq.s32.totalorder %s18, 0
      %p39 = por %p37, %p38
      %p40 = scmp.ne.s32.totalorder %s26, %s27
      %p41 = scmp.eq.s32.totalorder %s19, 1
      %p42 = por %p40, %p41
      %p44 = scmp.ne.s32.totalorder %s27, %s43
      %p45 = scmp.eq.s32.totalorder %s19, 0
      %p46 = por %p44, %p45
      %s48 = sadd.s32 %s47, 1
      %p51 = scmp.eq.s32.totalorder %s13, 1
      %p52 = scmp.ne.s32.totalorder %s47, %s49
      %p53 = scmp.eq.s32.totalorder %s13, 0
      %p54 = por %p52, %p53
      %p55 = scmp.ne.s32.totalorder %s47, %s49
      %p56 = scmp.eq.s32.totalorder %s18, 1
      %p57 = por %p55, %p56
      %p58 = scmp.ne.s32.totalorder %s49, %s50
      %p59 = scmp.eq.s32.totalorder %s18, 0
      %p60 = por %p58, %p59
      %p61 = scmp.ne.s32.totalorder %s49, %s50
      %p62 = scmp.eq.s32.totalorder %s19, 1
      %p63 = por %p61, %p62
      %p65 = scmp.ne.s32.totalorder %s50, %s64
      %p66 = scmp.eq.s32.totalorder %s19, 0
      %p67 = por %p65, %p66
      %s68 = ssub.s32 %s13, %s20
      %p69 = scmp.eq.s32.totalorder %s68, 0
      %s71 = sadd.s32 %s70, 1
      %s72 = scalar_select %p69, %s70, %s71
      %p75 = pneg %p69
      %p76 = scmp.eq.s32.totalorder %s13, 1
      %p77 = por %p75, %p76
      %p78 = scmp.ne.s32.totalorder %s70, %s73
      %p79 = scmp.eq.s32.totalorder %s13, 0
      %p80 = por %p78, %p79
      %p81 = scmp.ne.s32.totalorder %s70, %s73
      %p82 = scmp.eq.s32.totalorder %s18, 1
      %p83 = por %p81, %p82
      %p84 = scmp.ne.s32.totalorder %s73, %s74
      %p85 = scmp.eq.s32.totalorder %s18, 0
      %p86 = por %p84, %p85
      %p87 = scmp.ne.s32.totalorder %s73, %s74
      %p88 = scmp.eq.s32.totalorder %s19, 1
      %p89 = por %p87, %p88
      %p91 = scmp.ne.s32.totalorder %s74, %s90
      %p92 = scmp.eq.s32.totalorder %s19, 0
      %p93 = por %p91, %p92
      %s94 = ssub.s32 %s13, %s20
      %p95 = scmp.eq.s32.totalorder %s94, 0
      %s97 = sadd.s32 %s96, 1
      %s98 = scalar_select %p95, %s96, %s97
      %p101 = pneg %p95
      %p102 = scmp.eq.s32.totalorder %s13, 1
      %p103 = por %p101, %p102
      %p104 = scmp.ne.s32.totalorder %s96, %s99
      %p105 = scmp.eq.s32.totalorder %s13, 0
      %p106 = por %p104, %p105
      %p107 = scmp.ne.s32.totalorder %s96, %s99
      %p108 = scmp.eq.s32.totalorder %s18, 1
      %p109 = por %p107, %p108
      %p110 = scmp.ne.s32.totalorder %s99, %s100
      %p111 = scmp.eq.s32.totalorder %s18, 0
      %p112 = por %p110, %p111
      %p113 = scmp.ne.s32.totalorder %s99, %s100
      %p114 = scmp.eq.s32.totalorder %s19, 1
      %p115 = por %p113, %p114
      %p117 = scmp.ne.s32.totalorder %s100, %s116
      %p118 = scmp.eq.s32.totalorder %s19, 0
      %p119 = por %p117, %p118
      %p120 = scmp.le.s32.totalorder 1, %s13
      %p121 = scmp.lt.s32.totalorder %s13, 3
      %p122 = pnand %p120, %p121
      %p123 = pneg %p122
      // Predicated region
      $region9: #{tpu_custom_call.1} parent=5 // pred_check
        _
      $region10: #{tpu_custom_call.1} parent=5 // pred_check_branch
        %125 = sbr.rel (%p122) target = $region12
      $region11: #{tpu_custom_call.1} parent=5 // pred_region
        %s126 = ssub.s32 %s13, 1
        // Predicated region
        $region13: #{tpu_custom_call.1} parent=11 // pred_check
          %p127 = pneg %p60
        $region14: #{tpu_custom_call.1} parent=11 // pred_check_branch
          %129 = sbr.rel (%p127) target = $region16
        $region15: #{tpu_custom_call.1} parent=11 // pred_region
          _
        $region16: #{tpu_custom_call.1} parent=11 // pred_fallthru
          _
      $region12: #{tpu_custom_call.1} parent=5 // pred_fallthru
        _
      %p130 = scmp.lt.s32.totalorder %s13, 2
      // Predicated region
      $region17: #{tpu_custom_call.1} parent=5 // pred_check
        %p131 = pneg %p130
      $region18: #{tpu_custom_call.1} parent=5 // pred_check_branch
        %133 = sbr.rel (%p131) target = $region20
      $region19: #{tpu_custom_call.1} parent=5 // pred_region
        // Predicated region
        $region21: #{tpu_custom_call.1} parent=19 // pred_check
          %p134 = pneg %p33
        $region22: #{tpu_custom_call.1} parent=19 // pred_check_branch
          %136 = sbr.rel (%p134) target = $region24
        $region23: #{tpu_custom_call.1} parent=19 // pred_region
          %p137 = scmp.lt.s32.totalorder %s13, 1
          %s138 = scalar_select %p137, %s13, 1
          %s139 = smul.addr %s138, 36
          %s140 = smul.addr %s139, 8
          %s141 = scalar_lea.vmem %s0, %s140
        $region24: #{tpu_custom_call.1} parent=19 // pred_fallthru
          _
      $region20: #{tpu_custom_call.1} parent=5 // pred_fallthru
        _
      %p142 = scmp.le.s32.totalorder 1, %s13
      %p143 = scmp.lt.s32.totalorder %s13, 3
      %p144 = pnand %p142, %p143
      %p145 = pneg %p144
      // Predicated region
      $region25: #{tpu_custom_call.1} parent=5 // pred_check
        _
      $region26: #{tpu_custom_call.1} parent=5 // pred_check_branch
        %147 = sbr.rel (%p144) target = $region28
      $region27: #{tpu_custom_call.1} parent=5 // pred_region
        %s148 = ssub.s32 %s13, 1
        %p149 = scmp.lt.s32.totalorder %s18, 1
        %s150 = scalar_select %p149, %s18, 1
        %s151 = smul.addr %s150, 36
        %s152 = smul.addr %s151, 8
        %s153 = scalar_lea.vmem %s0, %s152
        %p154 = pneg %p39
        %p155 = pneg %p36
        %p156 = pneg %p60
        %p157 = pneg %p57
        %p158 = pneg %p86
        %p159 = pneg %p83
        %p160 = scmp.lt.s32.totalorder %s18, 1
        %s161 = scalar_select %p160, %s18, 1
        %s162 = smul.addr %s161, 32
        %s163 = smul.addr %s162, 8
        %s164 = scalar_lea.vmem %s2, %s163
        %p165 = pneg %p112
        %p166 = pneg %p109
        %s167 = sand.u32 %s99, 1
        %s168 = scalar_lea.sflag [#allocation3], %s167
        %s169 = sand.u32 %s99, 1
        %s170 = smul.addr %s169, 2
        %s171 = scalar_lea.vmem [#allocation2], %s170
        %p172 = scmp.lt.s32.totalorder %s18, 1
        %s173 = scalar_select %p172, %s18, 1
        %s174 = smul.addr %s173, 36
        %s175 = smul.addr %s174, 8
        %s176 = scalar_lea.vmem %s0, %s175
        %p177 = scmp.lt.s32.totalorder %s18, 1
        %s178 = scalar_select %p177, %s18, 1
        %s179 = smul.addr %s178, 32
        %s180 = smul.addr %s179, 8
        %s181 = scalar_lea.vmem %s2, %s180
        %v182 = vld [vmem:[%s176] sm:$0xff]
        %v183 = vld [vmem:[%s176 + $0x8] sm:$0xff]
        %v184 = vld [vmem:[%s176 + $0x10] sm:$0xff]
        %v185 = vld [vmem:[%s176 + $0x18] sm:$0xff]
        %v186 = vld [vmem:[%s176 + $0x20] sm:$0xff]
        %v187 = vld [vmem:[%s176 + $0x28] sm:$0xff]
        %v188 = vld [vmem:[%s176 + $0x30] sm:$0xff]
        %v189 = vld [vmem:[%s176 + $0x38] sm:$0xff]
        %v190 = vld [vmem:[%s176 + $0x40] sm:$0xff]
        %v191 = vld [vmem:[%s176 + $0x48] sm:$0xff]
        %v192 = vld [vmem:[%s176 + $0x50] sm:$0xff]
        %v193 = vld [vmem:[%s176 + $0x58] sm:$0xff]
        %v194 = vld [vmem:[%s176 + $0x60] sm:$0xff]
        %v195 = vld [vmem:[%s176 + $0x68] sm:$0xff]
        %v196 = vld [vmem:[%s176 + $0x70] sm:$0xff]
        %v197 = vld [vmem:[%s176 + $0x78] sm:$0xff]
        %v198 = vld [vmem:[%s176 + $0x80] sm:$0xff]
        %v199 = vld [vmem:[%s176 + $0x88] sm:$0xff]
        %v200 = vld [vmem:[%s176 + $0x90] sm:$0xff]
        %v201 = vld [vmem:[%s176 + $0x98] sm:$0xff]
        %v202 = vld [vmem:[%s176 + $0xa0] sm:$0xff]
        %v203 = vld [vmem:[%s176 + $0xa8] sm:$0xff]
        %v204 = vld [vmem:[%s176 + $0xb0] sm:$0xff]
        %v205 = vld [vmem:[%s176 + $0xb8] sm:$0xff]
        %v206 = vld [vmem:[%s176 + $0xc0] sm:$0xff]
        %v207 = vld [vmem:[%s176 + $0xc8] sm:$0xff]
        %v208 = vld [vmem:[%s176 + $0xd0] sm:$0xff]
        %v209 = vld [vmem:[%s176 + $0xd8] sm:$0xff]
        %v210 = vld [vmem:[%s176 + $0xe0] sm:$0xff]
        %v211 = vld [vmem:[%s176 + $0xe8] sm:$0xff]
        %v212 = vld [vmem:[%s176 + $0xf0] sm:$0xff]
        %v213 = vld [vmem:[%s176 + $0xf8] sm:$0xff]
        %v214 = vld [vmem:[%s176 + $0x100] sm:$0xff]
        %v215 = vld [vmem:[%s176 + $0x108] sm:$0xff]
        %v216 = vld [vmem:[%s176 + $0x110] sm:$0xff]
        %v217 = vld [vmem:[%s176 + $0x118] sm:$0xff]
        %v218 = vld [vmem:[%s1] sm:$0xff]
        %v219 = vld [vmem:[%s1 + $0x8] sm:$0xf]
        %s220 = scalar_lea.vmem %s1, 16
        %v221 = vld [vmem:[%s220] sm:$0xff]
        %v222 = vld [vmem:[%s220 + $0x8] sm:$0xf]
        %vm223 = vcmask 97280
        %v225 = vsel %vm223, %v184, 0
        %v228 = vsel %vm223, %v185, 0
        %v231 = vsel %vm223, %v186, 0
        %v234 = vsel %vm223, %v187, 0
        %v237 = vsel %vm223, %v188, 0
        %v240 = vsel %vm223, %v189, 0
        %v243 = vsel %vm223, %v190, 0
        %v246 = vsel %vm223, %v191, 0
        %v249 = vsel %vm223, %v192, 0
        %v252 = vsel %vm223, %v193, 0
        %v255 = vsel %vm223, %v194, 0
        %v258 = vsel %vm223, %v195, 0
        %v261 = vsel %vm223, %v196, 0
        %v264 = vsel %vm223, %v197, 0
        %v267 = vsel %vm223, %v198, 0
        %v270 = vsel %vm223, %v199, 0
        %v273 = vsel %vm223, %v200, 0
        %v276 = vsel %vm223, %v201, 0
        %v279 = vsel %vm223, %v202, 0
        %v282 = vsel %vm223, %v203, 0
        %v285 = vsel %vm223, %v204, 0
        %v288 = vsel %vm223, %v205, 0
        %v291 = vsel %vm223, %v206, 0
        %v294 = vsel %vm223, %v207, 0
        %v297 = vsel %vm223, %v208, 0
        %v300 = vsel %vm223, %v209, 0
        %v303 = vsel %vm223, %v210, 0
        %v306 = vsel %vm223, %v211, 0
        %v309 = vsel %vm223, %v212, 0
        %v312 = vsel %vm223, %v213, 0
        %v315 = vsel %vm223, %v214, 0
        %v318 = vsel %vm223, %v215, 0
        %vm320 = vcmask 1043456
        %v322 = vsel %vm320, %v222, 0
        %324 = vmatprep.subr.mxu0 0.0
        %325 = vmatpush1.msra.mxu0 0.0
        %326 = vmatprep.subr.mxu0 0.0
        %327 = vmatpush1.msra.mxu0 0.0
        %328 = vmatprep.subr.mxu0 0.0
        %329 = vmatpush1.msra.mxu0 0.0
        %330 = vmatprep.subr.mxu0 0.0
        %331 = vmatpush1.msra.mxu0 0.0
        %332 = vmatprep.subr.mxu0 0.0
        %333 = vmatpush1.msra.mxu0 0.0
        %334 = vmatprep.subr.mxu0 0.0
        %335 = vmatpush1.msra.mxu0 0.0
        %336 = vmatprep.subr.mxu0 0.0
        %337 = vmatpush1.msra.mxu0 0.0
        %338 = vmatprep.subr.mxu0 0.0
        %339 = vmatpush1.msra.mxu0 0.0
        %340 = vmatprep.subr.mxu0 0.0
        %341 = vmatpush1.msra.mxu0 0.0
        %342 = vmatprep.subr.mxu0 0.0
        %343 = vmatpush1.msra.mxu0 0.0
        %344 = vmatprep.subr.mxu0 0.0
        %345 = vmatpush1.msra.mxu0 0.0
        %346 = vmatprep.subr.mxu0 0.0
        %347 = vmatpush1.msra.mxu0 0.0
        %348 = vmatprep.subr.mxu0 0.0
        %349 = vmatpush1.msra.mxu0 0.0
        %350 = vmatprep.subr.mxu0 0.0
        %351 = vmatpush1.msra.mxu0 0.0
        %352 = vmatprep.subr.mxu0 0.0
        %353 = vmatpush1.msra.mxu0 %v322
        %354 = vmatprep.subr.mxu0 0.0
        %355 = vmatpush1.msra.mxu0 %v221
        %356 = vmatprep.subr.mxu0 0.0
        %357 = vmatpush2.msra.mxu0 0.0
        %358 = vmatprep.subr.mxu0 0.0
        %359 = vmatpush2.msra.mxu0 0.0
        %360 = vmatprep.subr.mxu0 0.0
        %361 = vmatpush2.msra.mxu0 0.0
        %362 = vmatprep.subr.mxu0 0.0
        %363 = vmatpush2.msra.mxu0 0.0
        %364 = vmatprep.subr.mxu0 0.0
        %365 = vmatpush2.msra.mxu0 0.0
        %366 = vmatprep.subr.mxu0 0.0
        %367 = vmatpush2.msra.mxu0 0.0
        %368 = vmatprep.subr.mxu0 0.0
        %369 = vmatpush2.msra.mxu0 0.0
        %370 = vmatprep.subr.mxu0 0.0
        %371 = vmatpush2.msra.mxu0 0.0
        %372 = vmatprep.subr.mxu0 0.0
        %373 = vmatpush2.msra.mxu0 0.0
        %374 = vmatprep.subr.mxu0 0.0
        %375 = vmatpush2.msra.mxu0 0.0
        %376 = vmatprep.subr.mxu0 0.0
        %377 = vmatpush2.msra.mxu0 0.0
        %378 = vmatprep.subr.mxu0 0.0
        %379 = vmatpush2.msra.mxu0 0.0
        %380 = vmatprep.subr.mxu0 0.0
        %381 = vmatpush2.msra.mxu0 0.0
        %382 = vmatprep.subr.mxu0 0.0
        %383 = vmatpush2.msra.mxu0 0.0
        %384 = vmatprep.subr.mxu0 0.0
        %385 = vmatpush2.msra.mxu0 0.0
        %386 = vmatprep.subr.mxu0 0.0
        %387 = vmatpush2.msra.mxu0 0.0
        %388 = vmatprep.mubr.f32.mxu0 0.0
        %389 = vmatmul.mubr.f32.gmra.mxu0 %v225
        %v390 = vpop.f32.mrf.mxu0
        %v391 = vadd.f32 0.0, %v390
        %v392 = vpop.f32.mrf.mxu0
        %393 = vmatprep.mubr.f32.mxu0 0.0
        %394 = vmatmul.mubr.f32.gmra.mxu0 %v228
        %v395 = vpop.f32.mrf.mxu0
        %v396 = vadd.f32 0.0, %v395
        %v397 = vpop.f32.mrf.mxu0
        %398 = vmatprep.mubr.f32.mxu0 0.0
        %399 = vmatmul.mubr.f32.gmra.mxu0 %v231
        %v400 = vpop.f32.mrf.mxu0
        %v401 = vadd.f32 0.0, %v400
        %v402 = vpop.f32.mrf.mxu0
        %403 = vmatprep.mubr.f32.mxu0 0.0
        %404 = vmatmul.mubr.f32.gmra.mxu0 %v234
        %v405 = vpop.f32.mrf.mxu0
        %v406 = vadd.f32 0.0, %v405
        %v407 = vpop.f32.mrf.mxu0
        %408 = vmatprep.mubr.f32.mxu0 0.0
        %409 = vmatmul.mubr.f32.gmra.mxu0 %v237
        %v410 = vpop.f32.mrf.mxu0
        %v411 = vadd.f32 0.0, %v410
        %v412 = vpop.f32.mrf.mxu0
        %413 = vmatprep.mubr.f32.mxu0 0.0
        %414 = vmatmul.mubr.f32.gmra.mxu0 %v240
        %v415 = vpop.f32.mrf.mxu0
        %v416 = vadd.f32 0.0, %v415
        %v417 = vpop.f32.mrf.mxu0
        %418 = vmatprep.mubr.f32.mxu0 0.0
        %419 = vmatmul.mubr.f32.gmra.mxu0 %v243
        %v420 = vpop.f32.mrf.mxu0
        %v421 = vadd.f32 0.0, %v420
        %v422 = vpop.f32.mrf.mxu0
        %423 = vmatprep.mubr.f32.mxu0 0.0
        %424 = vmatmul.mubr.f32.gmra.mxu0 %v246
        %v425 = vpop.f32.mrf.mxu0
        %v426 = vadd.f32 0.0, %v425
        %v427 = vpop.f32.mrf.mxu0
        %428 = vmatprep.mubr.f32.mxu0 0.0
        %429 = vmatmul.mubr.f32.gmra.mxu0 %v249
        %v430 = vpop.f32.mrf.mxu0
        %v431 = vadd.f32 0.0, %v430
        %v432 = vpop.f32.mrf.mxu0
        %433 = vmatprep.mubr.f32.mxu0 0.0
        %434 = vmatmul.mubr.f32.gmra.mxu0 %v252
        %v435 = vpop.f32.mrf.mxu0
        %v436 = vadd.f32 0.0, %v435
        %v437 = vpop.f32.mrf.mxu0
        %438 = vmatprep.mubr.f32.mxu0 0.0
        %439 = vmatmul.mubr.f32.gmra.mxu0 %v255
        %v440 = vpop.f32.mrf.mxu0
        %v441 = vadd.f32 0.0, %v440
        %v442 = vpop.f32.mrf.mxu0
        %443 = vmatprep.mubr.f32.mxu0 0.0
        %444 = vmatmul.mubr.f32.gmra.mxu0 %v258
        %v445 = vpop.f32.mrf.mxu0
        %v446 = vadd.f32 0.0, %v445
        %v447 = vpop.f32.mrf.mxu0
        %448 = vmatprep.mubr.f32.mxu0 0.0
        %449 = vmatmul.mubr.f32.gmra.mxu0 %v261
        %v450 = vpop.f32.mrf.mxu0
        %v451 = vadd.f32 0.0, %v450
        %v452 = vpop.f32.mrf.mxu0
        %453 = vmatprep.mubr.f32.mxu0 0.0
        %454 = vmatmul.mubr.f32.gmra.mxu0 %v264
        %v455 = vpop.f32.mrf.mxu0
        %v456 = vadd.f32 0.0, %v455
        %v457 = vpop.f32.mrf.mxu0
        %458 = vmatprep.mubr.f32.mxu0 0.0
        %459 = vmatmul.mubr.f32.gmra.mxu0 %v267
        %v460 = vpop.f32.mrf.mxu0
        %v461 = vadd.f32 0.0, %v460
        %v462 = vpop.f32.mrf.mxu0
        %463 = vmatprep.mubr.f32.mxu0 0.0
        %464 = vmatmul.mubr.f32.gmra.mxu0 %v270
        %v465 = vpop.f32.mrf.mxu0
        %v466 = vadd.f32 0.0, %v465
        %v467 = vpop.f32.mrf.mxu0
        %468 = vmatprep.mubr.f32.mxu0 0.0
        %469 = vmatmul.mubr.f32.gmra.mxu0 %v273
        %v470 = vpop.f32.mrf.mxu0
        %v471 = vadd.f32 0.0, %v470
        %v472 = vpop.f32.mrf.mxu0
        %473 = vmatprep.mubr.f32.mxu0 0.0
        %474 = vmatmul.mubr.f32.gmra.mxu0 %v276
        %v475 = vpop.f32.mrf.mxu0
        %v476 = vadd.f32 0.0, %v475
        %v477 = vpop.f32.mrf.mxu0
        %478 = vmatprep.mubr.f32.mxu0 0.0
        %479 = vmatmul.mubr.f32.gmra.mxu0 %v279
        %v480 = vpop.f32.mrf.mxu0
        %v481 = vadd.f32 0.0, %v480
        %v482 = vpop.f32.mrf.mxu0
        %483 = vmatprep.mubr.f32.mxu0 0.0
        %484 = vmatmul.mubr.f32.gmra.mxu0 %v282
        %v485 = vpop.f32.mrf.mxu0
        %v486 = vadd.f32 0.0, %v485
        %v487 = vpop.f32.mrf.mxu0
        %488 = vmatprep.mubr.f32.mxu0 0.0
        %489 = vmatmul.mubr.f32.gmra.mxu0 %v285
        %v490 = vpop.f32.mrf.mxu0
        %v491 = vadd.f32 0.0, %v490
        %v492 = vpop.f32.mrf.mxu0
        %493 = vmatprep.mubr.f32.mxu0 0.0
        %494 = vmatmul.mubr.f32.gmra.mxu0 %v288
        %v495 = vpop.f32.mrf.mxu0
        %v496 = vadd.f32 0.0, %v495
        %v497 = vpop.f32.mrf.mxu0
        %498 = vmatprep.mubr.f32.mxu0 0.0
        %499 = vmatmul.mubr.f32.gmra.mxu0 %v291
        %v500 = vpop.f32.mrf.mxu0
        %v501 = vadd.f32 0.0, %v500
        %v502 = vpop.f32.mrf.mxu0
        %503 = vmatprep.mubr.f32.mxu0 0.0
        %504 = vmatmul.mubr.f32.gmra.mxu0 %v294
        %v505 = vpop.f32.mrf.mxu0
        %v506 = vadd.f32 0.0, %v505
        %v507 = vpop.f32.mrf.mxu0
        %508 = vmatprep.mubr.f32.mxu0 0.0
        %509 = vmatmul.mubr.f32.gmra.mxu0 %v297
        %v510 = vpop.f32.mrf.mxu0
        %v511 = vadd.f32 0.0, %v510
        %v512 = vpop.f32.mrf.mxu0
        %513 = vmatprep.mubr.f32.mxu0 0.0
        %514 = vmatmul.mubr.f32.gmra.mxu0 %v300
        %v515 = vpop.f32.mrf.mxu0
        %v516 = vadd.f32 0.0, %v515
        %v517 = vpop.f32.mrf.mxu0
        %518 = vmatprep.mubr.f32.mxu0 0.0
        %519 = vmatmul.mubr.f32.gmra.mxu0 %v303
        %v520 = vpop.f32.mrf.mxu0
        %v521 = vadd.f32 0.0, %v520
        %v522 = vpop.f32.mrf.mxu0
        %523 = vmatprep.mubr.f32.mxu0 0.0
        %524 = vmatmul.mubr.f32.gmra.mxu0 %v306
        %v525 = vpop.f32.mrf.mxu0
        %v526 = vadd.f32 0.0, %v525
        %v527 = vpop.f32.mrf.mxu0
        %528 = vmatprep.mubr.f32.mxu0 0.0
        %529 = vmatmul.mubr.f32.gmra.mxu0 %v309
        %v530 = vpop.f32.mrf.mxu0
        %v531 = vadd.f32 0.0, %v530
        %v532 = vpop.f32.mrf.mxu0
        %533 = vmatprep.mubr.f32.mxu0 0.0
        %534 = vmatmul.mubr.f32.gmra.mxu0 %v312
        %v535 = vpop.f32.mrf.mxu0
        %v536 = vadd.f32 0.0, %v535
        %v537 = vpop.f32.mrf.mxu0
        %538 = vmatprep.mubr.f32.mxu0 0.0
        %539 = vmatmul.mubr.f32.gmra.mxu0 %v315
        %v540 = vpop.f32.mrf.mxu0
        %v541 = vadd.f32 0.0, %v540
        %v542 = vpop.f32.mrf.mxu0
        %543 = vmatprep.mubr.f32.mxu0 0.0
        %544 = vmatmul.mubr.f32.gmra.mxu0 %v318
        %v545 = vpop.f32.mrf.mxu0
        %v546 = vadd.f32 0.0, %v545
        %v547 = vpop.f32.mrf.mxu0
        %548 = vdwg.mxu0
        %v550 = vsel %vm223, %v182, 0
        %v553 = vsel %vm223, %v183, 0
        %v556 = vsel %vm320, %v219, 0
        %558 = vmatprep.subr.mxu0 0.0
        %559 = vmatpush1.msra.mxu0 0.0
        %560 = vmatprep.subr.mxu0 0.0
        %561 = vmatpush1.msra.mxu0 0.0
        %562 = vmatprep.subr.mxu0 0.0
        %563 = vmatpush1.msra.mxu0 0.0
        %564 = vmatprep.subr.mxu0 0.0
        %565 = vmatpush1.msra.mxu0 0.0
        %566 = vmatprep.subr.mxu0 0.0
        %567 = vmatpush1.msra.mxu0 0.0
        %568 = vmatprep.subr.mxu0 0.0
        %569 = vmatpush1.msra.mxu0 0.0
        %570 = vmatprep.subr.mxu0 0.0
        %571 = vmatpush1.msra.mxu0 0.0
        %572 = vmatprep.subr.mxu0 0.0
        %573 = vmatpush1.msra.mxu0 0.0
        %574 = vmatprep.subr.mxu0 0.0
        %575 = vmatpush1.msra.mxu0 0.0
        %576 = vmatprep.subr.mxu0 0.0
        %577 = vmatpush1.msra.mxu0 0.0
        %578 = vmatprep.subr.mxu0 0.0
        %579 = vmatpush1.msra.mxu0 0.0
        %580 = vmatprep.subr.mxu0 0.0
        %581 = vmatpush1.msra.mxu0 0.0
        %582 = vmatprep.subr.mxu0 0.0
        %583 = vmatpush1.msra.mxu0 0.0
        %584 = vmatprep.subr.mxu0 0.0
        %585 = vmatpush1.msra.mxu0 0.0
        %586 = vmatprep.subr.mxu0 0.0
        %587 = vmatpush1.msra.mxu0 %v556
        %588 = vmatprep.subr.mxu0 0.0
        %589 = vmatpush1.msra.mxu0 %v218
        %590 = vmatprep.subr.mxu0 0.0
        %591 = vmatpush2.msra.mxu0 0.0
        %592 = vmatprep.subr.mxu0 0.0
        %593 = vmatpush2.msra.mxu0 0.0
        %594 = vmatprep.subr.mxu0 0.0
        %595 = vmatpush2.msra.mxu0 0.0
        %596 = vmatprep.subr.mxu0 0.0
        %597 = vmatpush2.msra.mxu0 0.0
        %598 = vmatprep.subr.mxu0 0.0
        %599 = vmatpush2.msra.mxu0 0.0
        %600 = vmatprep.subr.mxu0 0.0
        %601 = vmatpush2.msra.mxu0 0.0
        %602 = vmatprep.subr.mxu0 0.0
        %603 = vmatpush2.msra.mxu0 0.0
        %604 = vmatprep.subr.mxu0 0.0
        %605 = vmatpush2.msra.mxu0 0.0
        %606 = vmatprep.subr.mxu0 0.0
        %607 = vmatpush2.msra.mxu0 0.0
        %608 = vmatprep.subr.mxu0 0.0
        %609 = vmatpush2.msra.mxu0 0.0
        %610 = vmatprep.subr.mxu0 0.0
        %611 = vmatpush2.msra.mxu0 0.0
        %612 = vmatprep.subr.mxu0 0.0
        %613 = vmatpush2.msra.mxu0 0.0
        %614 = vmatprep.subr.mxu0 0.0
        %615 = vmatpush2.msra.mxu0 0.0
        %616 = vmatprep.subr.mxu0 0.0
        %617 = vmatpush2.msra.mxu0 0.0
        %618 = vmatprep.subr.mxu0 0.0
        %619 = vmatpush2.msra.mxu0 0.0
        %620 = vmatprep.subr.mxu0 0.0
        %621 = vmatpush2.msra.mxu0 0.0
        %622 = vmatprep.mubr.f32.mxu0 0.0
        %623 = vmatmul.mubr.f32.gmra.mxu0 %v550
        %v624 = vpop.f32.mrf.mxu0
        %v625 = vadd.f32 %v391, %v624
        %v626 = vpop.f32.mrf.mxu0
        %627 = vmatprep.mubr.f32.mxu0 0.0
        %628 = vmatmul.mubr.f32.gmra.mxu0 %v553
        %v629 = vpop.f32.mrf.mxu0
        %v630 = vadd.f32 %v396, %v629
        %v631 = vpop.f32.mrf.mxu0
        %632 = vmatprep.mubr.f32.mxu0 0.0
        %633 = vmatmul.mubr.f32.gmra.mxu0 %v225
        %v634 = vpop.f32.mrf.mxu0
        %v635 = vadd.f32 %v401, %v634
        %v636 = vpop.f32.mrf.mxu0
        %637 = vmatprep.mubr.f32.mxu0 0.0
        %638 = vmatmul.mubr.f32.gmra.mxu0 %v228
        %v639 = vpop.f32.mrf.mxu0
        %v640 = vadd.f32 %v406, %v639
        %v641 = vpop.f32.mrf.mxu0
        %642 = vmatprep.mubr.f32.mxu0 0.0
        %643 = vmatmul.mubr.f32.gmra.mxu0 %v231
        %v644 = vpop.f32.mrf.mxu0
        %v645 = vadd.f32 %v411, %v644
        %v646 = vpop.f32.mrf.mxu0
        %647 = vmatprep.mubr.f32.mxu0 0.0
        %648 = vmatmul.mubr.f32.gmra.mxu0 %v234
        %v649 = vpop.f32.mrf.mxu0
        %v650 = vadd.f32 %v416, %v649
        %v651 = vpop.f32.mrf.mxu0
        %652 = vmatprep.mubr.f32.mxu0 0.0
        %653 = vmatmul.mubr.f32.gmra.mxu0 %v237
        %v654 = vpop.f32.mrf.mxu0
        %v655 = vadd.f32 %v421, %v654
        %v656 = vpop.f32.mrf.mxu0
        %657 = vmatprep.mubr.f32.mxu0 0.0
        %658 = vmatmul.mubr.f32.gmra.mxu0 %v240
        %v659 = vpop.f32.mrf.mxu0
        %v660 = vadd.f32 %v426, %v659
        %v661 = vpop.f32.mrf.mxu0
        %662 = vmatprep.mubr.f32.mxu0 0.0
        %663 = vmatmul.mubr.f32.gmra.mxu0 %v243
        %v664 = vpop.f32.mrf.mxu0
        %v665 = vadd.f32 %v431, %v664
        %v666 = vpop.f32.mrf.mxu0
        %667 = vmatprep.mubr.f32.mxu0 0.0
        %668 = vmatmul.mubr.f32.gmra.mxu0 %v246
        %v669 = vpop.f32.mrf.mxu0
        %v670 = vadd.f32 %v436, %v669
        %v671 = vpop.f32.mrf.mxu0
        %672 = vmatprep.mubr.f32.mxu0 0.0
        %673 = vmatmul.mubr.f32.gmra.mxu0 %v249
        %v674 = vpop.f32.mrf.mxu0
        %v675 = vadd.f32 %v441, %v674
        %v676 = vpop.f32.mrf.mxu0
        %677 = vmatprep.mubr.f32.mxu0 0.0
        %678 = vmatmul.mubr.f32.gmra.mxu0 %v252
        %v679 = vpop.f32.mrf.mxu0
        %v680 = vadd.f32 %v446, %v679
        %v681 = vpop.f32.mrf.mxu0
        %682 = vmatprep.mubr.f32.mxu0 0.0
        %683 = vmatmul.mubr.f32.gmra.mxu0 %v255
        %v684 = vpop.f32.mrf.mxu0
        %v685 = vadd.f32 %v451, %v684
        %v686 = vpop.f32.mrf.mxu0
        %687 = vmatprep.mubr.f32.mxu0 0.0
        %688 = vmatmul.mubr.f32.gmra.mxu0 %v258
        %v689 = vpop.f32.mrf.mxu0
        %v690 = vadd.f32 %v456, %v689
        %v691 = vpop.f32.mrf.mxu0
        %692 = vmatprep.mubr.f32.mxu0 0.0
        %693 = vmatmul.mubr.f32.gmra.mxu0 %v261
        %v694 = vpop.f32.mrf.mxu0
        %v695 = vadd.f32 %v461, %v694
        %v696 = vpop.f32.mrf.mxu0
        %697 = vmatprep.mubr.f32.mxu0 0.0
        %698 = vmatmul.mubr.f32.gmra.mxu0 %v264
        %v699 = vpop.f32.mrf.mxu0
        %v700 = vadd.f32 %v466, %v699
        %v701 = vpop.f32.mrf.mxu0
        %702 = vmatprep.mubr.f32.mxu0 0.0
        %703 = vmatmul.mubr.f32.gmra.mxu0 %v267
        %v704 = vpop.f32.mrf.mxu0
        %v705 = vadd.f32 %v471, %v704
        %v706 = vpop.f32.mrf.mxu0
        %707 = vmatprep.mubr.f32.mxu0 0.0
        %708 = vmatmul.mubr.f32.gmra.mxu0 %v270
        %v709 = vpop.f32.mrf.mxu0
        %v710 = vadd.f32 %v476, %v709
        %v711 = vpop.f32.mrf.mxu0
        %712 = vmatprep.mubr.f32.mxu0 0.0
        %713 = vmatmul.mubr.f32.gmra.mxu0 %v273
        %v714 = vpop.f32.mrf.mxu0
        %v715 = vadd.f32 %v481, %v714
        %v716 = vpop.f32.mrf.mxu0
        %717 = vmatprep.mubr.f32.mxu0 0.0
        %718 = vmatmul.mubr.f32.gmra.mxu0 %v276
        %v719 = vpop.f32.mrf.mxu0
        %v720 = vadd.f32 %v486, %v719
        %v721 = vpop.f32.mrf.mxu0
        %722 = vmatprep.mubr.f32.mxu0 0.0
        %723 = vmatmul.mubr.f32.gmra.mxu0 %v279
        %v724 = vpop.f32.mrf.mxu0
        %v725 = vadd.f32 %v491, %v724
        %v726 = vpop.f32.mrf.mxu0
        %727 = vmatprep.mubr.f32.mxu0 0.0
        %728 = vmatmul.mubr.f32.gmra.mxu0 %v282
        %v729 = vpop.f32.mrf.mxu0
        %v730 = vadd.f32 %v496, %v729
        %v731 = vpop.f32.mrf.mxu0
        %732 = vmatprep.mubr.f32.mxu0 0.0
        %733 = vmatmul.mubr.f32.gmra.mxu0 %v285
        %v734 = vpop.f32.mrf.mxu0
        %v735 = vadd.f32 %v501, %v734
        %v736 = vpop.f32.mrf.mxu0
        %737 = vmatprep.mubr.f32.mxu0 0.0
        %738 = vmatmul.mubr.f32.gmra.mxu0 %v288
        %v739 = vpop.f32.mrf.mxu0
        %v740 = vadd.f32 %v506, %v739
        %v741 = vpop.f32.mrf.mxu0
        %742 = vmatprep.mubr.f32.mxu0 0.0
        %743 = vmatmul.mubr.f32.gmra.mxu0 %v291
        %v744 = vpop.f32.mrf.mxu0
        %v745 = vadd.f32 %v511, %v744
        %v746 = vpop.f32.mrf.mxu0
        %747 = vmatprep.mubr.f32.mxu0 0.0
        %748 = vmatmul.mubr.f32.gmra.mxu0 %v294
        %v749 = vpop.f32.mrf.mxu0
        %v750 = vadd.f32 %v516, %v749
        %v751 = vpop.f32.mrf.mxu0
        %752 = vmatprep.mubr.f32.mxu0 0.0
        %753 = vmatmul.mubr.f32.gmra.mxu0 %v297
        %v754 = vpop.f32.mrf.mxu0
        %v755 = vadd.f32 %v521, %v754
        %v756 = vpop.f32.mrf.mxu0
        %757 = vmatprep.mubr.f32.mxu0 0.0
        %758 = vmatmul.mubr.f32.gmra.mxu0 %v300
        %v759 = vpop.f32.mrf.mxu0
        %v760 = vadd.f32 %v526, %v759
        %v761 = vpop.f32.mrf.mxu0
        %762 = vmatprep.mubr.f32.mxu0 0.0
        %763 = vmatmul.mubr.f32.gmra.mxu0 %v303
        %v764 = vpop.f32.mrf.mxu0
        %v765 = vadd.f32 %v531, %v764
        %v766 = vpop.f32.mrf.mxu0
        %767 = vmatprep.mubr.f32.mxu0 0.0
        %768 = vmatmul.mubr.f32.gmra.mxu0 %v306
        %v769 = vpop.f32.mrf.mxu0
        %v770 = vadd.f32 %v536, %v769
        %v771 = vpop.f32.mrf.mxu0
        %772 = vmatprep.mubr.f32.mxu0 0.0
        %773 = vmatmul.mubr.f32.gmra.mxu0 %v309
        %v774 = vpop.f32.mrf.mxu0
        %v775 = vadd.f32 %v541, %v774
        %v776 = vpop.f32.mrf.mxu0
        %777 = vmatprep.mubr.f32.mxu0 0.0
        %778 = vmatmul.mubr.f32.gmra.mxu0 %v312
        %v779 = vpop.f32.mrf.mxu0
        %v780 = vadd.f32 %v546, %v779
        %v781 = vpop.f32.mrf.mxu0
        %782 = vdwg.mxu0
        %s783 = scalar_lea.vmem %s1, 32
        %v784 = vld [vmem:[%s783] sm:$0xff]
        %v785 = vld [vmem:[%s783 + $0x8] sm:$0xf]
        %v787 = vsel %vm223, %v216, 0
        %v790 = vsel %vm223, %v217, 0
        %v793 = vsel %vm320, %v785, 0
        %795 = vmatprep.subr.mxu0 0.0
        %796 = vmatpush1.msra.mxu0 0.0
        %797 = vmatprep.subr.mxu0 0.0
        %798 = vmatpush1.msra.mxu0 0.0
        %799 = vmatprep.subr.mxu0 0.0
        %800 = vmatpush1.msra.mxu0 0.0
        %801 = vmatprep.subr.mxu0 0.0
        %802 = vmatpush1.msra.mxu0 0.0
        %803 = vmatprep.subr.mxu0 0.0
        %804 = vmatpush1.msra.mxu0 0.0
        %805 = vmatprep.subr.mxu0 0.0
        %806 = vmatpush1.msra.mxu0 0.0
        %807 = vmatprep.subr.mxu0 0.0
        %808 = vmatpush1.msra.mxu0 0.0
        %809 = vmatprep.subr.mxu0 0.0
        %810 = vmatpush1.msra.mxu0 0.0
        %811 = vmatprep.subr.mxu0 0.0
        %812 = vmatpush1.msra.mxu0 0.0
        %813 = vmatprep.subr.mxu0 0.0
        %814 = vmatpush1.msra.mxu0 0.0
        %815 = vmatprep.subr.mxu0 0.0
        %816 = vmatpush1.msra.mxu0 0.0
        %817 = vmatprep.subr.mxu0 0.0
        %818 = vmatpush1.msra.mxu0 0.0
        %819 = vmatprep.subr.mxu0 0.0
        %820 = vmatpush1.msra.mxu0 0.0
        %821 = vmatprep.subr.mxu0 0.0
        %822 = vmatpush1.msra.mxu0 0.0
        %823 = vmatprep.subr.mxu0 0.0
        %824 = vmatpush1.msra.mxu0 %v793
        %825 = vmatprep.subr.mxu0 0.0
        %826 = vmatpush1.msra.mxu0 %v784
        %827 = vmatprep.subr.mxu0 0.0
        %828 = vmatpush2.msra.mxu0 0.0
        %829 = vmatprep.subr.mxu0 0.0
        %830 = vmatpush2.msra.mxu0 0.0
        %831 = vmatprep.subr.mxu0 0.0
        %832 = vmatpush2.msra.mxu0 0.0
        %833 = vmatprep.subr.mxu0 0.0
        %834 = vmatpush2.msra.mxu0 0.0
        %835 = vmatprep.subr.mxu0 0.0
        %836 = vmatpush2.msra.mxu0 0.0
        %837 = vmatprep.subr.mxu0 0.0
        %838 = vmatpush2.msra.mxu0 0.0
        %839 = vmatprep.subr.mxu0 0.0
        %840 = vmatpush2.msra.mxu0 0.0
        %841 = vmatprep.subr.mxu0 0.0
        %842 = vmatpush2.msra.mxu0 0.0
        %843 = vmatprep.subr.mxu0 0.0
        %844 = vmatpush2.msra.mxu0 0.0
        %845 = vmatprep.subr.mxu0 0.0
        %846 = vmatpush2.msra.mxu0 0.0
        %847 = vmatprep.subr.mxu0 0.0
        %848 = vmatpush2.msra.mxu0 0.0
        %849 = vmatprep.subr.mxu0 0.0
        %850 = vmatpush2.msra.mxu0 0.0
        %851 = vmatprep.subr.mxu0 0.0
        %852 = vmatpush2.msra.mxu0 0.0
        %853 = vmatprep.subr.mxu0 0.0
        %854 = vmatpush2.msra.mxu0 0.0
        %855 = vmatprep.subr.mxu0 0.0
        %856 = vmatpush2.msra.mxu0 0.0
        %857 = vmatprep.subr.mxu0 0.0
        %858 = vmatpush2.msra.mxu0 0.0
        %859 = vmatprep.mubr.f32.mxu0 0.0
        %860 = vmatmul.mubr.f32.gmra.mxu0 %v231
        %v861 = vpop.f32.mrf.mxu0
        %v862 = vadd.f32 0.0, %v861
        %v863 = vpop.f32.mrf.mxu0
        %864 = vmatprep.mubr.f32.mxu0 0.0
        %865 = vmatmul.mubr.f32.gmra.mxu0 %v234
        %v866 = vpop.f32.mrf.mxu0
        %v867 = vadd.f32 0.0, %v866
        %v868 = vpop.f32.mrf.mxu0
        %869 = vmatprep.mubr.f32.mxu0 0.0
        %870 = vmatmul.mubr.f32.gmra.mxu0 %v237
        %v871 = vpop.f32.mrf.mxu0
        %v872 = vadd.f32 0.0, %v871
        %v873 = vpop.f32.mrf.mxu0
        %874 = vmatprep.mubr.f32.mxu0 0.0
        %875 = vmatmul.mubr.f32.gmra.mxu0 %v240
        %v876 = vpop.f32.mrf.mxu0
        %v877 = vadd.f32 0.0, %v876
        %v878 = vpop.f32.mrf.mxu0
        %879 = vmatprep.mubr.f32.mxu0 0.0
        %880 = vmatmul.mubr.f32.gmra.mxu0 %v243
        %v881 = vpop.f32.mrf.mxu0
        %v882 = vadd.f32 0.0, %v881
        %v883 = vpop.f32.mrf.mxu0
        %884 = vmatprep.mubr.f32.mxu0 0.0
        %885 = vmatmul.mubr.f32.gmra.mxu0 %v246
        %v886 = vpop.f32.mrf.mxu0
        %v887 = vadd.f32 0.0, %v886
        %v888 = vpop.f32.mrf.mxu0
        %889 = vmatprep.mubr.f32.mxu0 0.0
        %890 = vmatmul.mubr.f32.gmra.mxu0 %v249
        %v891 = vpop.f32.mrf.mxu0
        %v892 = vadd.f32 0.0, %v891
        %v893 = vpop.f32.mrf.mxu0
        %894 = vmatprep.mubr.f32.mxu0 0.0
        %895 = vmatmul.mubr.f32.gmra.mxu0 %v252
        %v896 = vpop.f32.mrf.mxu0
        %v897 = vadd.f32 0.0, %v896
        %v898 = vpop.f32.mrf.mxu0
        %899 = vmatprep.mubr.f32.mxu0 0.0
        %900 = vmatmul.mubr.f32.gmra.mxu0 %v255
        %v901 = vpop.f32.mrf.mxu0
        %v902 = vadd.f32 0.0, %v901
        %v903 = vpop.f32.mrf.mxu0
        %904 = vmatprep.mubr.f32.mxu0 0.0
        %905 = vmatmul.mubr.f32.gmra.mxu0 %v258
        %v906 = vpop.f32.mrf.mxu0
        %v907 = vadd.f32 0.0, %v906
        %v908 = vpop.f32.mrf.mxu0
        %909 = vmatprep.mubr.f32.mxu0 0.0
        %910 = vmatmul.mubr.f32.gmra.mxu0 %v261
        %v911 = vpop.f32.mrf.mxu0
        %v912 = vadd.f32 0.0, %v911
        %v913 = vpop.f32.mrf.mxu0
        %914 = vmatprep.mubr.f32.mxu0 0.0
        %915 = vmatmul.mubr.f32.gmra.mxu0 %v264
        %v916 = vpop.f32.mrf.mxu0
        %v917 = vadd.f32 0.0, %v916
        %v918 = vpop.f32.mrf.mxu0
        %919 = vmatprep.mubr.f32.mxu0 0.0
        %920 = vmatmul.mubr.f32.gmra.mxu0 %v267
        %v921 = vpop.f32.mrf.mxu0
        %v922 = vadd.f32 0.0, %v921
        %v923 = vpop.f32.mrf.mxu0
        %924 = vmatprep.mubr.f32.mxu0 0.0
        %925 = vmatmul.mubr.f32.gmra.mxu0 %v270
        %v926 = vpop.f32.mrf.mxu0
        %v927 = vadd.f32 0.0, %v926
        %v928 = vpop.f32.mrf.mxu0
        %929 = vmatprep.mubr.f32.mxu0 0.0
        %930 = vmatmul.mubr.f32.gmra.mxu0 %v273
        %v931 = vpop.f32.mrf.mxu0
        %v932 = vadd.f32 0.0, %v931
        %v933 = vpop.f32.mrf.mxu0
        %934 = vmatprep.mubr.f32.mxu0 0.0
        %935 = vmatmul.mubr.f32.gmra.mxu0 %v276
        %v936 = vpop.f32.mrf.mxu0
        %v937 = vadd.f32 0.0, %v936
        %v938 = vpop.f32.mrf.mxu0
        %939 = vmatprep.mubr.f32.mxu0 0.0
        %940 = vmatmul.mubr.f32.gmra.mxu0 %v279
        %v941 = vpop.f32.mrf.mxu0
        %v942 = vadd.f32 0.0, %v941
        %v943 = vpop.f32.mrf.mxu0
        %944 = vmatprep.mubr.f32.mxu0 0.0
        %945 = vmatmul.mubr.f32.gmra.mxu0 %v282
        %v946 = vpop.f32.mrf.mxu0
        %v947 = vadd.f32 0.0, %v946
        %v948 = vpop.f32.mrf.mxu0
        %949 = vmatprep.mubr.f32.mxu0 0.0
        %950 = vmatmul.mubr.f32.gmra.mxu0 %v285
        %v951 = vpop.f32.mrf.mxu0
        %v952 = vadd.f32 0.0, %v951
        %v953 = vpop.f32.mrf.mxu0
        %954 = vmatprep.mubr.f32.mxu0 0.0
        %955 = vmatmul.mubr.f32.gmra.mxu0 %v288
        %v956 = vpop.f32.mrf.mxu0
        %v957 = vadd.f32 0.0, %v956
        %v958 = vpop.f32.mrf.mxu0
        %959 = vmatprep.mubr.f32.mxu0 0.0
        %960 = vmatmul.mubr.f32.gmra.mxu0 %v291
        %v961 = vpop.f32.mrf.mxu0
        %v962 = vadd.f32 0.0, %v961
        %v963 = vpop.f32.mrf.mxu0
        %964 = vmatprep.mubr.f32.mxu0 0.0
        %965 = vmatmul.mubr.f32.gmra.mxu0 %v294
        %v966 = vpop.f32.mrf.mxu0
        %v967 = vadd.f32 0.0, %v966
        %v968 = vpop.f32.mrf.mxu0
        %969 = vmatprep.mubr.f32.mxu0 0.0
        %970 = vmatmul.mubr.f32.gmra.mxu0 %v297
        %v971 = vpop.f32.mrf.mxu0
        %v972 = vadd.f32 0.0, %v971
        %v973 = vpop.f32.mrf.mxu0
        %974 = vmatprep.mubr.f32.mxu0 0.0
        %975 = vmatmul.mubr.f32.gmra.mxu0 %v300
        %v976 = vpop.f32.mrf.mxu0
        %v977 = vadd.f32 0.0, %v976
        %v978 = vpop.f32.mrf.mxu0
        %979 = vmatprep.mubr.f32.mxu0 0.0
        %980 = vmatmul.mubr.f32.gmra.mxu0 %v303
        %v981 = vpop.f32.mrf.mxu0
        %v982 = vadd.f32 0.0, %v981
        %v983 = vpop.f32.mrf.mxu0
        %984 = vmatprep.mubr.f32.mxu0 0.0
        %985 = vmatmul.mubr.f32.gmra.mxu0 %v306
        %v986 = vpop.f32.mrf.mxu0
        %v987 = vadd.f32 0.0, %v986
        %v988 = vpop.f32.mrf.mxu0
        %989 = vmatprep.mubr.f32.mxu0 0.0
        %990 = vmatmul.mubr.f32.gmra.mxu0 %v309
        %v991 = vpop.f32.mrf.mxu0
        %v992 = vadd.f32 0.0, %v991
        %v993 = vpop.f32.mrf.mxu0
        %994 = vmatprep.mubr.f32.mxu0 0.0
        %995 = vmatmul.mubr.f32.gmra.mxu0 %v312
        %v996 = vpop.f32.mrf.mxu0
        %v997 = vadd.f32 0.0, %v996
        %v998 = vpop.f32.mrf.mxu0
        %999 = vmatprep.mubr.f32.mxu0 0.0
        %1000 = vmatmul.mubr.f32.gmra.mxu0 %v315
        %v1001 = vpop.f32.mrf.mxu0
        %v1002 = vadd.f32 0.0, %v1001
        %v1003 = vpop.f32.mrf.mxu0
        %1004 = vmatprep.mubr.f32.mxu0 0.0
        %1005 = vmatmul.mubr.f32.gmra.mxu0 %v318
        %v1006 = vpop.f32.mrf.mxu0
        %v1007 = vadd.f32 0.0, %v1006
        %v1008 = vpop.f32.mrf.mxu0
        %1009 = vmatprep.mubr.f32.mxu0 0.0
        %1010 = vmatmul.mubr.f32.gmra.mxu0 %v787
        %v1011 = vpop.f32.mrf.mxu0
        %v1012 = vadd.f32 0.0, %v1011
        %v1013 = vpop.f32.mrf.mxu0
        %1014 = vmatprep.mubr.f32.mxu0 0.0
        %1015 = vmatmul.mubr.f32.gmra.mxu0 %v790
        %v1016 = vpop.f32.mrf.mxu0
        %v1017 = vadd.f32 0.0, %v1016
        %v1018 = vpop.f32.mrf.mxu0
        %1019 = vdwg.mxu0
        %v1020 = vadd.f32 %v625, %v862
        %v1021 = vadd.f32 %v630, %v867
        %v1022 = vadd.f32 %v635, %v872
        %v1023 = vadd.f32 %v640, %v877
        %v1024 = vadd.f32 %v645, %v882
        %v1025 = vadd.f32 %v650, %v887
        %v1026 = vadd.f32 %v655, %v892
        %v1027 = vadd.f32 %v660, %v897
        %v1028 = vadd.f32 %v665, %v902
        %v1029 = vadd.f32 %v670, %v907
        %v1030 = vadd.f32 %v675, %v912
        %v1031 = vadd.f32 %v680, %v917
        %v1032 = vadd.f32 %v685, %v922
        %v1033 = vadd.f32 %v690, %v927
        %v1034 = vadd.f32 %v695, %v932
        %v1035 = vadd.f32 %v700, %v937
        %v1036 = vadd.f32 %v705, %v942
        %v1037 = vadd.f32 %v710, %v947
        %v1038 = vadd.f32 %v715, %v952
        %v1039 = vadd.f32 %v720, %v957
        %v1040 = vadd.f32 %v725, %v962
        %v1041 = vadd.f32 %v730, %v967
        %v1042 = vadd.f32 %v735, %v972
        %v1043 = vadd.f32 %v740, %v977
        %v1044 = vadd.f32 %v745, %v982
        %v1045 = vadd.f32 %v750, %v987
        %v1046 = vadd.f32 %v755, %v992
        %v1047 = vadd.f32 %v760, %v997
        %v1048 = vadd.f32 %v765, %v1002
        %v1049 = vadd.f32 %v770, %v1007
        %v1050 = vadd.f32 %v775, %v1012
        %v1051 = vadd.f32 %v780, %v1017
        %vm1052 = vcmask 64512
        %1053 = vst.msk [vmem:[%s181] sm:$0xff] %vm1052, %v1020
        %1054 = vst.msk [vmem:[%s181 + $0x8] sm:$0xff] %vm1052, %v1021
        %1055 = vst.msk [vmem:[%s181 + $0x10] sm:$0xff] %vm1052, %v1022
        %1056 = vst.msk [vmem:[%s181 + $0x18] sm:$0xff] %vm1052, %v1023
        %1057 = vst.msk [vmem:[%s181 + $0x20] sm:$0xff] %vm1052, %v1024
        %1058 = vst.msk [vmem:[%s181 + $0x28] sm:$0xff] %vm1052, %v1025
        %1059 = vst.msk [vmem:[%s181 + $0x30] sm:$0xff] %vm1052, %v1026
        %1060 = vst.msk [vmem:[%s181 + $0x38] sm:$0xff] %vm1052, %v1027
        %1061 = vst.msk [vmem:[%s181 + $0x40] sm:$0xff] %vm1052, %v1028
        %1062 = vst.msk [vmem:[%s181 + $0x48] sm:$0xff] %vm1052, %v1029
        %1063 = vst.msk [vmem:[%s181 + $0x50] sm:$0xff] %vm1052, %v1030
        %1064 = vst.msk [vmem:[%s181 + $0x58] sm:$0xff] %vm1052, %v1031
        %1065 = vst.msk [vmem:[%s181 + $0x60] sm:$0xff] %vm1052, %v1032
        %1066 = vst.msk [vmem:[%s181 + $0x68] sm:$0xff] %vm1052, %v1033
        %1067 = vst.msk [vmem:[%s181 + $0x70] sm:$0xff] %vm1052, %v1034
        %1068 = vst.msk [vmem:[%s181 + $0x78] sm:$0xff] %vm1052, %v1035
        %1069 = vst.msk [vmem:[%s181 + $0x80] sm:$0xff] %vm1052, %v1036
        %1070 = vst.msk [vmem:[%s181 + $0x88] sm:$0xff] %vm1052, %v1037
        %1071 = vst.msk [vmem:[%s181 + $0x90] sm:$0xff] %vm1052, %v1038
        %1072 = vst.msk [vmem:[%s181 + $0x98] sm:$0xff] %vm1052, %v1039
        %1073 = vst.msk [vmem:[%s181 + $0xa0] sm:$0xff] %vm1052, %v1040
        %1074 = vst.msk [vmem:[%s181 + $0xa8] sm:$0xff] %vm1052, %v1041
        %1075 = vst.msk [vmem:[%s181 + $0xb0] sm:$0xff] %vm1052, %v1042
        %1076 = vst.msk [vmem:[%s181 + $0xb8] sm:$0xff] %vm1052, %v1043
        %1077 = vst.msk [vmem:[%s181 + $0xc0] sm:$0xff] %vm1052, %v1044
        %1078 = vst.msk [vmem:[%s181 + $0xc8] sm:$0xff] %vm1052, %v1045
        %1079 = vst.msk [vmem:[%s181 + $0xd0] sm:$0xff] %vm1052, %v1046
        %1080 = vst.msk [vmem:[%s181 + $0xd8] sm:$0xff] %vm1052, %v1047
        %1081 = vst.msk [vmem:[%s181 + $0xe0] sm:$0xff] %vm1052, %v1048
        %1082 = vst.msk [vmem:[%s181 + $0xe8] sm:$0xff] %vm1052, %v1049
        %1083 = vst.msk [vmem:[%s181 + $0xf0] sm:$0xff] %vm1052, %v1050
        %1084 = vst.msk [vmem:[%s181 + $0xf8] sm:$0xff] %vm1052, %v1051
        %v1085 = vsel %vm1052, %v1020, 0.0
        %v1086 = vsel %vm1052, %v1021, 0.0
        %v1087 = vadd.f32 %v1085, %v1086
        %v1088 = vsel %vm1052, %v1022, 0.0
        %v1089 = vadd.f32 %v1087, %v1088
        %v1090 = vsel %vm1052, %v1023, 0.0
        %v1091 = vadd.f32 %v1089, %v1090
        %v1092 = vsel %vm1052, %v1024, 0.0
        %v1093 = vadd.f32 %v1091, %v1092
        %v1094 = vsel %vm1052, %v1025, 0.0
        %v1095 = vadd.f32 %v1093, %v1094
        %v1096 = vsel %vm1052, %v1026, 0.0
        %v1097 = vadd.f32 %v1095, %v1096
        %v1098 = vsel %vm1052, %v1027, 0.0
        %v1099 = vadd.f32 %v1097, %v1098
        %v1100 = vsel %vm1052, %v1028, 0.0
        %v1101 = vadd.f32 %v1099, %v1100
        %v1102 = vsel %vm1052, %v1029, 0.0
        %v1103 = vadd.f32 %v1101, %v1102
        %v1104 = vsel %vm1052, %v1030, 0.0
        %v1105 = vadd.f32 %v1103, %v1104
        %v1106 = vsel %vm1052, %v1031, 0.0
        %v1107 = vadd.f32 %v1105, %v1106
        %v1108 = vsel %vm1052, %v1032, 0.0
        %v1109 = vadd.f32 %v1107, %v1108
        %v1110 = vsel %vm1052, %v1033, 0.0
        %v1111 = vadd.f32 %v1109, %v1110
        %v1112 = vsel %vm1052, %v1034, 0.0
        %v1113 = vadd.f32 %v1111, %v1112
        %v1114 = vsel %vm1052, %v1035, 0.0
        %v1115 = vadd.f32 %v1113, %v1114
        %v1116 = vsel %vm1052, %v1036, 0.0
        %v1117 = vadd.f32 %v1115, %v1116
        %v1118 = vsel %vm1052, %v1037, 0.0
        %v1119 = vadd.f32 %v1117, %v1118
        %v1120 = vsel %vm1052, %v1038, 0.0
        %v1121 = vadd.f32 %v1119, %v1120
        %v1122 = vsel %vm1052, %v1039, 0.0
        %v1123 = vadd.f32 %v1121, %v1122
        %v1124 = vsel %vm1052, %v1040, 0.0
        %v1125 = vadd.f32 %v1123, %v1124
        %v1126 = vsel %vm1052, %v1041, 0.0
        %v1127 = vadd.f32 %v1125, %v1126
        %v1128 = vsel %vm1052, %v1042, 0.0
        %v1129 = vadd.f32 %v1127, %v1128
        %v1130 = vsel %vm1052, %v1043, 0.0
        %v1131 = vadd.f32 %v1129, %v1130
        %v1132 = vsel %vm1052, %v1044, 0.0
        %v1133 = vadd.f32 %v1131, %v1132
        %v1134 = vsel %vm1052, %v1045, 0.0
        %v1135 = vadd.f32 %v1133, %v1134
        %v1136 = vsel %vm1052, %v1046, 0.0
        %v1137 = vadd.f32 %v1135, %v1136
        %v1138 = vsel %vm1052, %v1047, 0.0
        %v1139 = vadd.f32 %v1137, %v1138
        %v1140 = vsel %vm1052, %v1048, 0.0
        %v1141 = vadd.f32 %v1139, %v1140
        %v1142 = vsel %vm1052, %v1049, 0.0
        %v1143 = vadd.f32 %v1141, %v1142
        %v1144 = vsel %vm1052, %v1050, 0.0
        %v1145 = vadd.f32 %v1143, %v1144
        %v1146 = vsel %vm1052, %v1051, 0.0
        %v1147 = vadd.f32 %v1145, %v1146
        %v1148 = vrot.slane %v1147, 4
        %v1149 = vadd.f32 %v1147, %v1148
        %v1150 = vrot.slane %v1149, 2
        %v1151 = vadd.f32 %v1149, %v1150
        %v1152 = vrot.slane %v1151, 1
        %v1153 = vadd.f32 %v1151, %v1152
        %vm1154 = vcmask 57344
        %1155 = vst.msk [vmem:[%s171] sm:$0x1] %vm1154, %v1153
        %v1156 = vmul.f32 %v1020, %v1020
        %v1157 = vmul.f32 %v1021, %v1021
        %v1158 = vmul.f32 %v1022, %v1022
        %v1159 = vmul.f32 %v1023, %v1023
        %v1160 = vmul.f32 %v1024, %v1024
        %v1161 = vmul.f32 %v1025, %v1025
        %v1162 = vmul.f32 %v1026, %v1026
        %v1163 = vmul.f32 %v1027, %v1027
        %v1164 = vmul.f32 %v1028, %v1028
        %v1165 = vmul.f32 %v1029, %v1029
        %v1166 = vmul.f32 %v1030, %v1030
        %v1167 = vmul.f32 %v1031, %v1031
        %v1168 = vmul.f32 %v1032, %v1032
        %v1169 = vmul.f32 %v1033, %v1033
        %v1170 = vmul.f32 %v1034, %v1034
        %v1171 = vmul.f32 %v1035, %v1035
        %v1172 = vmul.f32 %v1036, %v1036
        %v1173 = vmul.f32 %v1037, %v1037
        %v1174 = vmul.f32 %v1038, %v1038
        %v1175 = vmul.f32 %v1039, %v1039
        %v1176 = vmul.f32 %v1040, %v1040
        %v1177 = vmul.f32 %v1041, %v1041
        %v1178 = vmul.f32 %v1042, %v1042
        %v1179 = vmul.f32 %v1043, %v1043
        %v1180 = vmul.f32 %v1044, %v1044
        %v1181 = vmul.f32 %v1045, %v1045
        %v1182 = vmul.f32 %v1046, %v1046
        %v1183 = vmul.f32 %v1047, %v1047
        %v1184 = vmul.f32 %v1048, %v1048
        %v1185 = vmul.f32 %v1049, %v1049
        %v1186 = vmul.f32 %v1050, %v1050
        %v1187 = vmul.f32 %v1051, %v1051
        %v1188 = vsel %vm1052, %v1156, 0.0
        %v1189 = vsel %vm1052, %v1157, 0.0
        %v1190 = vadd.f32 %v1188, %v1189
        %v1191 = vsel %vm1052, %v1158, 0.0
        %v1192 = vadd.f32 %v1190, %v1191
        %v1193 = vsel %vm1052, %v1159, 0.0
        %v1194 = vadd.f32 %v1192, %v1193
        %v1195 = vsel %vm1052, %v1160, 0.0
        %v1196 = vadd.f32 %v1194, %v1195
        %v1197 = vsel %vm1052, %v1161, 0.0
        %v1198 = vadd.f32 %v1196, %v1197
        %v1199 = vsel %vm1052, %v1162, 0.0
        %v1200 = vadd.f32 %v1198, %v1199
        %v1201 = vsel %vm1052, %v1163, 0.0
        %v1202 = vadd.f32 %v1200, %v1201
        %v1203 = vsel %vm1052, %v1164, 0.0
        %v1204 = vadd.f32 %v1202, %v1203
        %v1205 = vsel %vm1052, %v1165, 0.0
        %v1206 = vadd.f32 %v1204, %v1205
        %v1207 = vsel %vm1052, %v1166, 0.0
        %v1208 = vadd.f32 %v1206, %v1207
        %v1209 = vsel %vm1052, %v1167, 0.0
        %v1210 = vadd.f32 %v1208, %v1209
        %v1211 = vsel %vm1052, %v1168, 0.0
        %v1212 = vadd.f32 %v1210, %v1211
        %v1213 = vsel %vm1052, %v1169, 0.0
        %v1214 = vadd.f32 %v1212, %v1213
        %v1215 = vsel %vm1052, %v1170, 0.0
        %v1216 = vadd.f32 %v1214, %v1215
        %v1217 = vsel %vm1052, %v1171, 0.0
        %v1218 = vadd.f32 %v1216, %v1217
        %v1219 = vsel %vm1052, %v1172, 0.0
        %v1220 = vadd.f32 %v1218, %v1219
        %v1221 = vsel %vm1052, %v1173, 0.0
        %v1222 = vadd.f32 %v1220, %v1221
        %v1223 = vsel %vm1052, %v1174, 0.0
        %v1224 = vadd.f32 %v1222, %v1223
        %v1225 = vsel %vm1052, %v1175, 0.0
        %v1226 = vadd.f32 %v1224, %v1225
        %v1227 = vsel %vm1052, %v1176, 0.0
        %v1228 = vadd.f32 %v1226, %v1227
        %v1229 = vsel %vm1052, %v1177, 0.0
        %v1230 = vadd.f32 %v1228, %v1229
        %v1231 = vsel %vm1052, %v1178, 0.0
        %v1232 = vadd.f32 %v1230, %v1231
        %v1233 = vsel %vm1052, %v1179, 0.0
        %v1234 = vadd.f32 %v1232, %v1233
        %v1235 = vsel %vm1052, %v1180, 0.0
        %v1236 = vadd.f32 %v1234, %v1235
        %v1237 = vsel %vm1052, %v1181, 0.0
        %v1238 = vadd.f32 %v1236, %v1237
        %v1239 = vsel %vm1052, %v1182, 0.0
        %v1240 = vadd.f32 %v1238, %v1239
        %v1241 = vsel %vm1052, %v1183, 0.0
        %v1242 = vadd.f32 %v1240, %v1241
        %v1243 = vsel %vm1052, %v1184, 0.0
        %v1244 = vadd.f32 %v1242, %v1243
        %v1245 = vsel %vm1052, %v1185, 0.0
        %v1246 = vadd.f32 %v1244, %v1245
        %v1247 = vsel %vm1052, %v1186, 0.0
        %v1248 = vadd.f32 %v1246, %v1247
        %v1249 = vsel %vm1052, %v1187, 0.0
        %v1250 = vadd.f32 %v1248, %v1249
        %v1251 = vrot.slane %v1250, 4
        %v1252 = vadd.f32 %v1250, %v1251
        %v1253 = vrot.slane %v1252, 2
        %v1254 = vadd.f32 %v1252, %v1253
        %v1255 = vrot.slane %v1254, 1
        %v1256 = vadd.f32 %v1254, %v1255
        %1257 = vst.msk [vmem:[%s171 + $0x1] sm:$0x1] %vm1154, %v1256
        %p1258 = scmp.lt.s32.totalorder %s18, 1
        %s1259 = scalar_select %p1258, %s18, 1
        %s1260 = smul.addr %s1259, 32
        %s1261 = smul.addr %s1260, 8
        %s1262 = scalar_lea.vmem %s2, %s1261
        %s1263 = sand.u32 %s99, 1
        %s1264 = scalar_lea.sflag [#allocation3], %s1263
        %s1265 = sand.u32 %s99, 1
        %s1266 = smul.addr %s1265, 2
        %s1267 = scalar_lea.vmem [#allocation2], %s1266
        // Predicated region
        $region29: #{tpu_custom_call.1} parent=27 // pred_check
          %p1268 = pneg %p83
        $region30: #{tpu_custom_call.1} parent=27 // pred_check_branch
          %1270 = sbr.rel (%p1268) target = $region32
        $region31: #{tpu_custom_call.1} parent=27 // pred_region
          _
        $region32: #{tpu_custom_call.1} parent=27 // pred_fallthru
          _
        // Predicated region
        $region33: #{tpu_custom_call.1} parent=27 // pred_check
          %p1271 = pneg %p109
        $region34: #{tpu_custom_call.1} parent=27 // pred_check_branch
          %1273 = sbr.rel (%p1271) target = $region36
        $region35: #{tpu_custom_call.1} parent=27 // pred_region
          %s1275 = ssub.s32 32, 32
          %1276 = vsyncadd %s1264, %s1275
          %s1277 = smul.addr %s18, 32
          %s1278 = scalar_lea.hbm %s3, %s1277
          %s1280 = sshll.u32 %s1267, 4
          %s1281 = int_to_ptr.vmem [resolvable:$true] %s1280
          %1283 = dma.vmem_to_hbm [thread:$0]  %s1281, 32, %s1278, %s1264
        $region36: #{tpu_custom_call.1} parent=27 // pred_fallthru
          _
      $region28: #{tpu_custom_call.1} parent=5 // pred_fallthru
        _
      %p1284 = scmp.le.s32.totalorder 2, %s13
      // Predicated region
      $region37: #{tpu_custom_call.1} parent=5 // pred_check
        %p1285 = pneg %p1284
      $region38: #{tpu_custom_call.1} parent=5 // pred_check_branch
        %1287 = sbr.rel (%p1285) target = $region40
      $region39: #{tpu_custom_call.1} parent=5 // pred_region
        %s1288 = ssub.s32 %s13, 2
        // Predicated region
        $region41: #{tpu_custom_call.1} parent=39 // pred_check
          %p1289 = pneg %p89
        $region42: #{tpu_custom_call.1} parent=39 // pred_check_branch
          %1291 = sbr.rel (%p1289) target = $region44
        $region43: #{tpu_custom_call.1} parent=39 // pred_region
          %p1292 = scmp.lt.s32.totalorder %s19, 1
          %s1293 = scalar_select %p1292, %s19, 1
          %s1294 = smul.addr %s1293, 32
          %s1295 = smul.addr %s1294, 8
          %s1296 = scalar_lea.vmem %s2, %s1295
        $region44: #{tpu_custom_call.1} parent=39 // pred_fallthru
          _
        // Predicated region
        $region45: #{tpu_custom_call.1} parent=39 // pred_check
          %p1297 = pneg %p115
        $region46: #{tpu_custom_call.1} parent=39 // pred_check_branch
          %1299 = sbr.rel (%p1297) target = $region48
        $region47: #{tpu_custom_call.1} parent=39 // pred_region
          %s1300 = sand.u32 %s100, 1
          %s1301 = scalar_lea.sflag [#allocation3], %s1300
          %s1302 = sand.u32 %s100, 1
          %s1303 = smul.addr %s1302, 2
          %s1304 = scalar_lea.vmem [#allocation2], %s1303
          %1305 = dma.done %s1301, 32
        $region48: #{tpu_custom_call.1} parent=39 // pred_fallthru
          _
      $region40: #{tpu_custom_call.1} parent=5 // pred_fallthru
        _
    $region6: #{tpu_custom_call.1} parent=1 // loop_footer
      %s17 = sadd.s32 1, %s13
    $region7: #{tpu_custom_call.1} parent=1 // loop_footer_branch
      %12 = sbr.rel target = $region3
    $region8: #{tpu_custom_call.1} parent=1 // loop_exit
      _
    %1306 = vsyncpa [#allocation3], 1
    %s1307 = scalar_lea.sflag [#allocation3], 1
    %1308 = vsyncpa %s1307, 1

</llo_original>
